<compile_context>
chip_gen: v7x
topology: tpu7x:2x2x1
jax: 0.10.0
libtpu: 0.0.40
codegen_flags: <defaults>
</compile_context>

<pallas_src>
import jax
import jax.numpy as jnp
from jax.experimental import pallas as pl
from jax.experimental.pallas import tpu as pltpu

LANE = 128


def _round_up(n, m):
    return ((n + m - 1) // m) * m


def _fused_classifier_kernel(x_ref, we_ref, be_ref, wc_ref, bc_ref, o_ref):
    """Fused encoder-linear -> ReLU -> classifier-linear.

    x_ref : [B, Fin]        activations
    we_ref: [Fin, E]        encoder weight (already transposed to in x out)
    be_ref: [1, E]          encoder bias row
    wc_ref: [E, Cpad]       classifier weight, last dim zero-padded to 128
    bc_ref: [1, Cpad]       classifier bias row, zero-padded to 128
    o_ref : [B, Cpad]       lane-dense padded output
    """
    # Encoder projection + bias + ReLU; intermediate h never touches HBM.
    h = jnp.dot(x_ref[...], we_ref[...], preferred_element_type=jnp.float32)
    h = jnp.maximum(h + be_ref[...], 0.0)
    # Classifier head on the padded (lane-dense) output slab.
    out = jnp.dot(h.astype(wc_ref.dtype), wc_ref[...],
                  preferred_element_type=jnp.float32)
    o_ref[...] = (out + bc_ref[...]).astype(o_ref.dtype)


def fused_classifier_forward(x, enc_w_t, enc_b_row, clf_w_t_pad, clf_b_row_pad):
    """One pallas_call: relu(x @ enc_w_t + enc_b) @ clf_w_t_pad + clf_b_pad."""
    B, Fin = x.shape
    Fin2, E = enc_w_t.shape
    E2, Cpad = clf_w_t_pad.shape
    assert Fin == Fin2 and E == E2
    assert enc_b_row.shape == (1, E)
    assert clf_b_row_pad.shape == (1, Cpad)

    vmem = lambda: pl.BlockSpec(memory_space=pltpu.MemorySpace.VMEM)
    return pl.pallas_call(
        _fused_classifier_kernel,
        out_shape=jax.ShapeDtypeStruct((B, Cpad), x.dtype),
        in_specs=[vmem(), vmem(), vmem(), vmem(), vmem()],
        out_specs=vmem(),
    )(x, enc_w_t, enc_b_row, clf_w_t_pad, clf_b_row_pad)


class ClassifierPallas:
    """Mirrors slp.modules.classifier.Classifier: encoder -> Linear(E, C)."""

    def __init__(self, in_features, encoded_features, num_classes, key):
        k1, k2, k3, k4 = jax.random.split(key, 4)
        # Encoder stand-in (injected module in the original): Linear + ReLU.
        # TODO(synk): the real encoder is an arbitrary injected nn.Module.
        self.enc_w = jax.random.normal(
            k1, (encoded_features, in_features), jnp.float32) * 0.1  # torch layout (out, in)
        self.enc_b = jax.random.normal(k2, (encoded_features,), jnp.float32) * 0.1
        # clf = FF(E, C, activation='none', layer_norm=False, dropout=0.0) == nn.Linear(E, C)
        self.clf_w = jax.random.normal(
            k3, (num_classes, encoded_features), jnp.float32) * 0.1  # torch layout (out, in)
        self.clf_b = jax.random.normal(k4, (num_classes,), jnp.float32) * 0.1

        self.num_classes = num_classes
        cpad = _round_up(num_classes, LANE)

        # One-time kernel-friendly parameter layouts (done in setup, not per call):
        #   - weights transposed to [in, out]
        #   - classifier weight/bias zero-padded on the class dim to a lane-dense 128
        #   - biases reshaped to (1, out) rows for VPU broadcast inside the kernel
        self.enc_w_t = jnp.asarray(self.enc_w.T)                       # [Fin, E]
        self.enc_b_row = self.enc_b.reshape(1, encoded_features)       # [1, E]
        clf_w_t = self.clf_w.T                                         # [E, C]
        self.clf_w_t_pad = jnp.zeros(
            (encoded_features, cpad), jnp.float32).at[:, :num_classes].set(clf_w_t)
        self.clf_b_row_pad = jnp.zeros(
            (1, cpad), jnp.float32).at[:, :num_classes].set(self.clf_b.reshape(1, -1))

    def __call__(self, x):
        out_pad = fused_classifier_forward(
            x, self.enc_w_t, self.enc_b_row, self.clf_w_t_pad, self.clf_b_row_pad)
        # Strip the lane padding in plain JAX (zero-cost slice of the lane axis).
        return out_pad[:, :self.num_classes]


if __name__ == "__main__":
    key = jax.random.PRNGKey(0)
    kx, kp = jax.random.split(key)

    batch = 8
    in_features = 32
    encoded_features = 32
    num_classes = 5

    x = jax.random.normal(kx, (batch, in_features), jnp.float32)

    model = ClassifierPallas(in_features, encoded_features, num_classes, kp)
    out = model(x)
    out = jax.block_until_ready(out)

    # Pure-JAX reference of the same forward pass.
    h_ref = jnp.maximum(x @ model.enc_w.T + model.enc_b, 0.0)
    ref = h_ref @ model.clf_w.T + model.clf_b
    assert out.shape == (batch, num_classes)
    assert jnp.allclose(out, ref, atol=1e-5, rtol=1e-5)

    print("KERNEL_OK")
</pallas_src>

<mosaic_0001>
module attributes {stable_mosaic.version = 11 : i64} {
  func.func @_fused_classifier_kernel(%arg0: memref<8x32xf32, #tpu.memory_space<vmem>>, %arg1: memref<32x32xf32, #tpu.memory_space<vmem>>, %arg2: memref<1x32xf32, #tpu.memory_space<vmem>>, %arg3: memref<32x128xf32, #tpu.memory_space<vmem>>, %arg4: memref<1x128xf32, #tpu.memory_space<vmem>>, %arg5: memref<8x128xf32, #tpu.memory_space<vmem>>) attributes {dimension_semantics = [], scalar_prefetch = 0 : i64, scratch_operands = 0 : i64, tpu.core_type = #tpu.core_type<tc>} {
    %c0 = arith.constant 0 : index
    %c0_0 = arith.constant 0 : index
    %0 = vector.load %arg0[%c0, %c0_0] : memref<8x32xf32, #tpu.memory_space<vmem>>, vector<8x32xf32>
    %c0_1 = arith.constant 0 : index
    %c0_2 = arith.constant 0 : index
    %1 = vector.load %arg1[%c0_1, %c0_2] : memref<32x32xf32, #tpu.memory_space<vmem>>, vector<32x32xf32>
    %cst = arith.constant dense<0.000000e+00> : vector<8x32xf32>
    %2 = tpu.matmul %0, %1, %cst {dimension_numbers = #tpu.dot_dimension_numbers<[1], [0], [0], [1], [0, 0, 1, 1], [], []>} : vector<8x32xf32>, vector<32x32xf32>, vector<8x32xf32> -> vector<8x32xf32>
    %c0_3 = arith.constant 0 : index
    %c0_4 = arith.constant 0 : index
    %3 = vector.load %arg2[%c0_3, %c0_4] : memref<1x32xf32, #tpu.memory_space<vmem>>, vector<1x32xf32>
    %4 = vector.broadcast %3 : vector<1x32xf32> to vector<8x32xf32>
    %5 = arith.addf %2, %4 : vector<8x32xf32>
    %cst_5 = arith.constant 0.000000e+00 : f32
    %6 = vector.broadcast %cst_5 : f32 to vector<8x32xf32>
    %7 = arith.maximumf %5, %6 : vector<8x32xf32>
    %c0_6 = arith.constant 0 : index
    %c0_7 = arith.constant 0 : index
    %8 = vector.load %arg3[%c0_6, %c0_7] : memref<32x128xf32, #tpu.memory_space<vmem>>, vector<32x128xf32>
    %cst_8 = arith.constant dense<0.000000e+00> : vector<8x128xf32>
    %9 = tpu.matmul %7, %8, %cst_8 {dimension_numbers = #tpu.dot_dimension_numbers<[1], [0], [0], [1], [0, 0, 1, 1], [], []>} : vector<8x32xf32>, vector<32x128xf32>, vector<8x128xf32> -> vector<8x128xf32>
    %c0_9 = arith.constant 0 : index
    %c0_10 = arith.constant 0 : index
    %10 = vector.load %arg4[%c0_9, %c0_10] : memref<1x128xf32, #tpu.memory_space<vmem>>, vector<1x128xf32>
    %11 = vector.broadcast %10 : vector<1x128xf32> to vector<8x128xf32>
    %12 = arith.addf %9, %11 : vector<8x128xf32>
    %c0_11 = arith.constant 0 : index
    %c0_12 = arith.constant 0 : index
    %13 = vector.load %arg5[%c0_11, %c0_12] : memref<8x128xf32, #tpu.memory_space<vmem>>, vector<8x128xf32>
    tpu.vector_store %arg5[%c0_11, %c0_12], %12 {strides = array<i32>} : memref<8x128xf32, #tpu.memory_space<vmem>>, vector<8x128xf32>,
    return
  }
}

</mosaic_0001>

<llo_original>
// kernel: tpu_custom_call.1
$region0: #{tpu_custom_call.1}
  #allocation0 [shape = 'u32[]', space=smem, size = 0x4, offset = 0x4, fixed_abs, tag = 'smem constant byte address 0x4 - core index']
  #allocation1 [shape = 'u32[144,128]{1,0:T(1,128)}', space=vmem, size = 0x12000, scoped, tag = 'internal scratch']
  %s0 = inlined_call_operand.hbm [shape: f32[8,32], index: 0, kind: input, shape index: {}]
  %s1 = inlined_call_operand.hbm [shape: f32[32,32], index: 1, kind: input, shape index: {}]
  %s2 = inlined_call_operand.vmem [shape: f32[1,32], index: 2, kind: input, shape index: {}]
  %s3 = inlined_call_operand.hbm [shape: f32[32,128], index: 3, kind: input, shape index: {}]
  %s4 = inlined_call_operand.vmem [shape: f32[1,128], index: 4, kind: input, shape index: {}]
  %s5 = inlined_call_operand.hbm [shape: f32[8,128], index: 5, kind: output, shape index: {}]
  %s6 = sld [smem:[#allocation0]]
  $region42: #{tpu_custom_call.1} parent=0
    _
  %s8 = ssub.s32 1, %s6
  %s9 = scalar_select 0, %s8, %s6
  $region1: #{tpu_custom_call.1} parent=0
    #allocation2 [shape = 'u8[4096]{0}', space=vmem, size = 0x1000, scoped, tag = 'input window, operand 0, single buffered']
    #allocation3 [shape = 's32[1]{0}', space=sflag, size = 0x4, scoped, tag = 'scoped memory for tpu_custom_call.1']
    #allocation4 [shape = 's32[1]{0}', space=sflag, size = 0x4, scoped, tag = 'scoped memory for tpu_custom_call.1']
    #allocation5 [shape = 'u8[16384]{0}', space=vmem, size = 0x4000, scoped, tag = 'input window, operand 1, single buffered']
    #allocation6 [shape = 's32[1]{0}', space=sflag, size = 0x4, scoped, tag = 'scoped memory for tpu_custom_call.1']
    #allocation7 [shape = 'u8[16384]{0}', space=vmem, size = 0x4000, scoped, tag = 'input window, operand 3, single buffered']
    #allocation8 [shape = 'u8[4096]{0}', space=vmem, size = 0x1000, scoped, tag = 'output window, operand 0, single buffered']
    %10 = vsyncpa [#allocation3], 0
    %11 = vsyncpa [#allocation6], 0
    %12 = vsyncpa [#allocation4], 0
    // Predicated region
    $region2: #{tpu_custom_call.1} parent=1 // pred_check
      _
    $region3: #{tpu_custom_call.1} parent=1 // pred_check_branch
      %14 = sbr.rel (0) target = $region5
    $region4: #{tpu_custom_call.1} parent=1 // pred_region
      %s16 = ssub.s32 128, 128
      %17 = vsyncadd [#allocation3], %s16
      %s19 = sshll.u32 [#allocation2], 4
      %s20 = int_to_ptr.vmem [resolvable:$true] %s19
      %22 = dma.hbm_to_vmem [thread:$0]  %s0, 128, %s20, [#allocation3]
    $region5: #{tpu_custom_call.1} parent=1 // pred_fallthru
      _
    // Predicated region
    $region6: #{tpu_custom_call.1} parent=1 // pred_check
      _
    $region7: #{tpu_custom_call.1} parent=1 // pred_check_branch
      %24 = sbr.rel (0) target = $region9
    $region8: #{tpu_custom_call.1} parent=1 // pred_region
      %s26 = ssub.s32 512, 512
      %27 = vsyncadd [#allocation6], %s26
      %s28 = sshll.u32 [#allocation5], 4
      %s29 = int_to_ptr.vmem [resolvable:$true] %s28
      %34 = dma.hbm_to_vmem [thread:$0]  %s1, 512, %s29, [#allocation6], 128, 128, 8
    $region9: #{tpu_custom_call.1} parent=1 // pred_fallthru
      _
    // Predicated region
    $region10: #{tpu_custom_call.1} parent=1 // pred_check
      _
    $region11: #{tpu_custom_call.1} parent=1 // pred_check_branch
      %36 = sbr.rel (0) target = $region13
    $region12: #{tpu_custom_call.1} parent=1 // pred_region
      _
    $region13: #{tpu_custom_call.1} parent=1 // pred_fallthru
      _
    // Predicated region
    $region14: #{tpu_custom_call.1} parent=1 // pred_check
      _
    $region15: #{tpu_custom_call.1} parent=1 // pred_check_branch
      %38 = sbr.rel (0) target = $region17
    $region16: #{tpu_custom_call.1} parent=1 // pred_region
      %s40 = ssub.s32 512, 512
      %41 = vsyncadd [#allocation6], %s40
      %s42 = sshll.u32 [#allocation7], 4
      %s43 = int_to_ptr.vmem [resolvable:$true] %s42
      %48 = dma.hbm_to_vmem [thread:$0]  %s3, 512, %s43, [#allocation6], 128, 128, 8
    $region17: #{tpu_custom_call.1} parent=1 // pred_fallthru
      _
    // Predicated region
    $region18: #{tpu_custom_call.1} parent=1 // pred_check
      _
    $region19: #{tpu_custom_call.1} parent=1 // pred_check_branch
      %50 = sbr.rel (0) target = $region21
    $region20: #{tpu_custom_call.1} parent=1 // pred_region
      _
    $region21: #{tpu_custom_call.1} parent=1 // pred_fallthru
      _
    // Predicated region
    $region22: #{tpu_custom_call.1} parent=1 // pred_check
      _
    $region23: #{tpu_custom_call.1} parent=1 // pred_check_branch
      %52 = sbr.rel (0) target = $region25
    $region24: #{tpu_custom_call.1} parent=1 // pred_region
      %53 = dma.done [#allocation3], 128
    $region25: #{tpu_custom_call.1} parent=1 // pred_fallthru
      _
    // Predicated region
    $region26: #{tpu_custom_call.1} parent=1 // pred_check
      _
    $region27: #{tpu_custom_call.1} parent=1 // pred_check_branch
      %55 = sbr.rel (0) target = $region29
    $region28: #{tpu_custom_call.1} parent=1 // pred_region
      %56 = dma.done [#allocation6], 512
    $region29: #{tpu_custom_call.1} parent=1 // pred_fallthru
      _
    // Predicated region
    $region30: #{tpu_custom_call.1} parent=1 // pred_check
      _
    $region31: #{tpu_custom_call.1} parent=1 // pred_check_branch
      %58 = sbr.rel (0) target = $region33
    $region32: #{tpu_custom_call.1} parent=1 // pred_region
      %59 = dma.done [#allocation6], 512
    $region33: #{tpu_custom_call.1} parent=1 // pred_fallthru
      _
    %v60 = vld [vmem:[#allocation2] sm:$0xff]
    %v61 = vld [vmem:[#allocation5] sm:$0xff]
    %v62 = vld [vmem:[#allocation5 + $0x8] sm:$0xff]
    %v63 = vld [vmem:[#allocation5 + $0x10] sm:$0xff]
    %v64 = vld [vmem:[#allocation5 + $0x18] sm:$0xff]
    %v65 = vld [vmem:[%s2] sm:$0x1]
    %v67 = vlaneseq
    %v68 = vshrl.u32 %v67, 7
    %v69 = vsub.s32 0, %v68
    %v70 = vrot.slane %v65, %v69
    %vm72 = vcmask 261120
    %v74 = vsel %vm72, %v60, 0
    %76 = vmatprep.subr.mxu0 0.0
    %77 = vmatpush1.msra.mxu0 %v61
    %78 = vmatprep.subr.mxu0 0.0
    %79 = vmatpush1.msra.mxu0 %v62
    %80 = vmatprep.subr.mxu0 0.0
    %81 = vmatpush1.msra.mxu0 %v63
    %82 = vmatprep.subr.mxu0 0.0
    %83 = vmatpush1.msra.mxu0 %v64
    %84 = vmatprep.subr.mxu0 0.0
    %85 = vmatpush1.msra.mxu0 0.0
    %86 = vmatprep.subr.mxu0 0.0
    %87 = vmatpush1.msra.mxu0 0.0
    %88 = vmatprep.subr.mxu0 0.0
    %89 = vmatpush1.msra.mxu0 0.0
    %90 = vmatprep.subr.mxu0 0.0
    %91 = vmatpush1.msra.mxu0 0.0
    %92 = vmatprep.subr.mxu0 0.0
    %93 = vmatpush1.msra.mxu0 0.0
    %94 = vmatprep.subr.mxu0 0.0
    %95 = vmatpush1.msra.mxu0 0.0
    %96 = vmatprep.subr.mxu0 0.0
    %97 = vmatpush1.msra.mxu0 0.0
    %98 = vmatprep.subr.mxu0 0.0
    %99 = vmatpush1.msra.mxu0 0.0
    %100 = vmatprep.subr.mxu0 0.0
    %101 = vmatpush1.msra.mxu0 0.0
    %102 = vmatprep.subr.mxu0 0.0
    %103 = vmatpush1.msra.mxu0 0.0
    %104 = vmatprep.subr.mxu0 0.0
    %105 = vmatpush1.msra.mxu0 0.0
    %106 = vmatprep.subr.mxu0 0.0
    %107 = vmatpush1.msra.mxu0 0.0
    %108 = vmatprep.subr.mxu0 0.0
    %109 = vmatpush1.msra.mxu0 0.0
    %110 = vmatprep.subr.mxu0 0.0
    %111 = vmatpush1.msra.mxu0 0.0
    %112 = vmatprep.subr.mxu0 0.0
    %113 = vmatpush1.msra.mxu0 0.0
    %114 = vmatprep.subr.mxu0 0.0
    %115 = vmatpush1.msra.mxu0 0.0
    %116 = vmatprep.subr.mxu0 0.0
    %117 = vmatpush1.msra.mxu0 0.0
    %118 = vmatprep.subr.mxu0 0.0
    %119 = vmatpush1.msra.mxu0 0.0
    %120 = vmatprep.subr.mxu0 0.0
    %121 = vmatpush1.msra.mxu0 0.0
    %122 = vmatprep.subr.mxu0 0.0
    %123 = vmatpush1.msra.mxu0 0.0
    %124 = vmatprep.subr.mxu0 0.0
    %125 = vmatpush1.msra.mxu0 0.0
    %126 = vmatprep.subr.mxu0 0.0
    %127 = vmatpush1.msra.mxu0 0.0
    %128 = vmatprep.subr.mxu0 0.0
    %129 = vmatpush1.msra.mxu0 0.0
    %130 = vmatprep.subr.mxu0 0.0
    %131 = vmatpush1.msra.mxu0 0.0
    %132 = vmatprep.subr.mxu0 0.0
    %133 = vmatpush1.msra.mxu0 0.0
    %134 = vmatprep.subr.mxu0 0.0
    %135 = vmatpush1.msra.mxu0 0.0
    %136 = vmatprep.subr.mxu0 0.0
    %137 = vmatpush1.msra.mxu0 0.0
    %138 = vmatprep.subr.mxu0 0.0
    %139 = vmatpush1.msra.mxu0 0.0
    %140 = vmatprep.mubr.f32.mxu0 0.0
    %141 = vmatmul.mubr.f32.gmra.mrb[0].mxu0 %v74
    %v142 = vpop.f32.mrb[0].mxu0
    %v143 = vadd.f32 %v70, %v142
    %v144 = vpop.f32.mrb[0].mxu0
    %145 = vdwg.mxu0
    %v146 = vmax.f32 %v143, 0.0
    %v147 = vld [vmem:[#allocation7] sm:$0xff]
    %v148 = vld [vmem:[#allocation7 + $0x8] sm:$0xff]
    %v149 = vld [vmem:[#allocation7 + $0x10] sm:$0xff]
    %v150 = vld [vmem:[#allocation7 + $0x18] sm:$0xff]
    %v151 = vld [vmem:[%s4] sm:$0x1]
    %v153 = vlaneseq
    %v154 = vshrl.u32 %v153, 7
    %v155 = vsub.s32 0, %v154
    %v156 = vrot.slane %v151, %v155
    %v159 = vsel %vm72, %v146, 0
    %161 = vmatprep.subr.mxu0 0.0
    %162 = vmatpush1.msra.mxu0 %v147
    %163 = vmatprep.subr.mxu0 0.0
    %164 = vmatpush1.msra.mxu0 %v148
    %165 = vmatprep.subr.mxu0 0.0
    %166 = vmatpush1.msra.mxu0 %v149
    %167 = vmatprep.subr.mxu0 0.0
    %168 = vmatpush1.msra.mxu0 %v150
    %169 = vmatprep.subr.mxu0 0.0
    %170 = vmatpush1.msra.mxu0 0.0
    %171 = vmatprep.subr.mxu0 0.0
    %172 = vmatpush1.msra.mxu0 0.0
    %173 = vmatprep.subr.mxu0 0.0
    %174 = vmatpush1.msra.mxu0 0.0
    %175 = vmatprep.subr.mxu0 0.0
    %176 = vmatpush1.msra.mxu0 0.0
    %177 = vmatprep.subr.mxu0 0.0
    %178 = vmatpush1.msra.mxu0 0.0
    %179 = vmatprep.subr.mxu0 0.0
    %180 = vmatpush1.msra.mxu0 0.0
    %181 = vmatprep.subr.mxu0 0.0
    %182 = vmatpush1.msra.mxu0 0.0
    %183 = vmatprep.subr.mxu0 0.0
    %184 = vmatpush1.msra.mxu0 0.0
    %185 = vmatprep.subr.mxu0 0.0
    %186 = vmatpush1.msra.mxu0 0.0
    %187 = vmatprep.subr.mxu0 0.0
    %188 = vmatpush1.msra.mxu0 0.0
    %189 = vmatprep.subr.mxu0 0.0
    %190 = vmatpush1.msra.mxu0 0.0
    %191 = vmatprep.subr.mxu0 0.0
    %192 = vmatpush1.msra.mxu0 0.0
    %193 = vmatprep.subr.mxu0 0.0
    %194 = vmatpush1.msra.mxu0 0.0
    %195 = vmatprep.subr.mxu0 0.0
    %196 = vmatpush1.msra.mxu0 0.0
    %197 = vmatprep.subr.mxu0 0.0
    %198 = vmatpush1.msra.mxu0 0.0
    %199 = vmatprep.subr.mxu0 0.0
    %200 = vmatpush1.msra.mxu0 0.0
    %201 = vmatprep.subr.mxu0 0.0
    %202 = vmatpush1.msra.mxu0 0.0
    %203 = vmatprep.subr.mxu0 0.0
    %204 = vmatpush1.msra.mxu0 0.0
    %205 = vmatprep.subr.mxu0 0.0
    %206 = vmatpush1.msra.mxu0 0.0
    %207 = vmatprep.subr.mxu0 0.0
    %208 = vmatpush1.msra.mxu0 0.0
    %209 = vmatprep.subr.mxu0 0.0
    %210 = vmatpush1.msra.mxu0 0.0
    %211 = vmatprep.subr.mxu0 0.0
    %212 = vmatpush1.msra.mxu0 0.0
    %213 = vmatprep.subr.mxu0 0.0
    %214 = vmatpush1.msra.mxu0 0.0
    %215 = vmatprep.subr.mxu0 0.0
    %216 = vmatpush1.msra.mxu0 0.0
    %217 = vmatprep.subr.mxu0 0.0
    %218 = vmatpush1.msra.mxu0 0.0
    %219 = vmatprep.subr.mxu0 0.0
    %220 = vmatpush1.msra.mxu0 0.0
    %221 = vmatprep.subr.mxu0 0.0
    %222 = vmatpush1.msra.mxu0 0.0
    %223 = vmatprep.subr.mxu0 0.0
    %224 = vmatpush1.msra.mxu0 0.0
    %225 = vmatprep.mubr.f32.mxu0 0.0
    %226 = vmatmul.mubr.f32.gmra.mrb[0].mxu0 %v159
    %v227 = vpop.f32.mrb[0].mxu0
    %v228 = vadd.f32 %v156, %v227
    %v229 = vpop.f32.mrb[0].mxu0
    %230 = vdwg.mxu0
    %231 = vst [vmem:[#allocation8] sm:$0xff] %v228
    // Predicated region
    $region34: #{tpu_custom_call.1} parent=1 // pred_check
      _
    $region35: #{tpu_custom_call.1} parent=1 // pred_check_branch
      %233 = sbr.rel (0) target = $region37
    $region36: #{tpu_custom_call.1} parent=1 // pred_region
      %s235 = ssub.s32 128, 128
      %236 = vsyncadd [#allocation4], %s235
      %s238 = sshll.u32 [#allocation8], 4
      %s239 = int_to_ptr.vmem [resolvable:$true] %s238
      %241 = dma.vmem_to_hbm [thread:$0]  %s239, 128, %s5, [#allocation4]
    $region37: #{tpu_custom_call.1} parent=1 // pred_fallthru
      _
    // Predicated region
    $region38: #{tpu_custom_call.1} parent=1 // pred_check
      _
    $region39: #{tpu_custom_call.1} parent=1 // pred_check_branch
      %243 = sbr.rel (0) target = $region41
    $region40: #{tpu_custom_call.1} parent=1 // pred_region
      %244 = dma.done [#allocation4], 128
    $region41: #{tpu_custom_call.1} parent=1 // pred_fallthru
      _
    %245 = vsyncpa [#allocation3], 1
    %246 = vsyncpa [#allocation6], 1
    %247 = vsyncpa [#allocation4], 1

</llo_original>
